<compile_context>
chip_gen: v6e
topology: v6e:2x2x1
jax: 0.10.0
libtpu: 0.0.40
codegen_flags: <defaults>
</compile_context>

<pallas_src>
import jax
import jax.numpy as jnp
from jax.experimental import pallas as pl
from jax.experimental.pallas import tpu as pltpu


def _round_up(x, m):
    return ((x + m - 1) // m) * m


def _vmem_capacity_bytes(default_bytes=64 * 1024 * 1024):
    # Per-TensorCore VMEM capacity; conservative (v7x) fallback if the query fails.
    try:
        info = pltpu.get_tpu_info()
        cap = getattr(info, "vmem_capacity_bytes", None)
        if cap:
            return int(cap)
    except Exception:
        pass
    return default_bytes


def discriminator_s_kernel(x_ref, w1_ref, b1_ref, w2_ref, b2_ref, o_ref):
    # encoder: (tm, D_in) @ (D_in, H) on the MXU, f32 accumulate; bias + sigmoid kept in f32
    # (v5e VPU/EUP have no bf16 path).
    h = jnp.dot(x_ref[...], w1_ref[...], preferred_element_type=jnp.float32)
    h = jax.nn.sigmoid(h + b1_ref[...])
    # TODO(synk): if the (tm, H) sigmoid ever becomes the binding slot on v7x (lane-sparse H<128
    # EUP work once DMA shrinks), restructure h to a lane-dense view before the elementwise chain.
    # decoder: VPU multiply + lane reduce (avoids a degenerate N=1 MXU matmul); b2 is an SMEM scalar.
    p = jnp.sum(h * w2_ref[...], axis=-1) + b2_ref[0, 0]          # (tm,)
    # lane-dense store: batch lands on the lane axis as a (1, tm) row.
    o_ref[...] = jax.nn.sigmoid(p)[None, :].astype(o_ref.dtype)


def discriminator_s(x, w1, b1, w2_row, b2, *, compute_dtype=jnp.bfloat16, tm_cap=16384):
    """x: (B, 2*num_items_s); w1: (2*num_items_s, H); b1: (1, H);
    w2_row: (1, H) (PyTorch decoder weight layout); b2: (1, 1).
    Returns (B, 1) f32 predictions."""
    B, D_in = x.shape
    H = w1.shape[1]

    # Stream x (and the matmul weight) in the MXU-native dtype; keep everything else f32.
    if x.dtype != compute_dtype:
        x = x.astype(compute_dtype)
    if w1.dtype != compute_dtype:
        w1 = w1.astype(compute_dtype)
    b1 = b1.astype(jnp.float32)
    w2_row = w2_row.astype(jnp.float32)
    b2 = b2.astype(jnp.float32)

    x_it = jnp.dtype(compute_dtype).itemsize
    sub = 16 if x_it == 2 else 8                      # sublane tiling granularity for compute_dtype
    lanes_din = _round_up(D_in, 128)

    # ---- derive the batch tile from a per-generation VMEM budget --------------------------
    vmem_cap = _vmem_capacity_bytes()
    target = vmem_cap // 2                            # keep total footprint <= half of VMEM
    fixed = 2 * _round_up(D_in, sub) * _round_up(H, 128) * x_it     # w1 (double-buffered, padded)
    fixed += 2 * 2 * 8 * _round_up(H, 128) * 4                      # b1 + w2_row (f32, dbuf)
    fixed += 1 << 20                                                # internal scratch slack
    per_row = 2 * (lanes_din * x_it + 8 * 4)          # x dbuf + (1, tm) f32 out dbuf (8-sublane pad)
    tm = max(128, (target - fixed) // per_row)
    tm = min(tm, tm_cap)
    tm = max(128, (tm // 128) * 128)                  # multiple of 128 -> lane-dense output tile

    if B < 128:
        # Tiny batch: pad rows up to one lane-dense 128-row tile (copy cost negligible).
        x = jnp.pad(x, ((0, 128 - B), (0, 0)))
        tm = 128
        num_tiles = 1
    else:
        # No wrapper-side pad: keep tm <= B so only the LAST block is partial; Pallas pads the
        # partial read and the garbage rows fall past [:B].
        tm = min(tm, (B // 128) * 128)
        num_tiles = pl.cdiv(B, tm)
        if num_tiles > 1 and num_tiles % 2 == 1:
            # Prefer an even tile count so the "parallel" batch axis splits across 2 TCs (v7x).
            alt_tm = max(128, _round_up(pl.cdiv(B, num_tiles + 1), 128))
            if pl.cdiv(B, alt_tm) % 2 == 0:
                tm = alt_tm
                num_tiles = pl.cdiv(B, alt_tm)

    out_w = num_tiles * tm                            # lane-dense output width (multiple of 128)

    # Explicit VMEM limit sized to the real footprint (v5e default scoped limit is only 16 MiB),
    # clamped to the chip's capacity (64 MiB/TC on v7x).
    est = 2 * (tm * lanes_din * x_it                                  # x double buffer
               + 8 * tm * 4                                           # (1, tm) f32 out, dbuf
               + _round_up(D_in, sub) * _round_up(H, 128) * x_it      # w1, dbuf
               + 2 * 8 * _round_up(H, 128) * 4)                       # b1 + w2_row, dbuf
    vmem_limit = int(min(vmem_cap, max(32 * 1024 * 1024, int(est * 1.3) + (2 << 20))))

    cost = pl.CostEstimate(
        flops=2 * B * D_in * H + 2 * B * H,
        transcendentals=B * (H + 1),
        bytes_accessed=B * D_in * x_it + D_in * H * x_it + B * 4 + 2 * H * 4 + 4,
    )

    out_row = pl.pallas_call(
        discriminator_s_kernel,
        out_shape=jax.ShapeDtypeStruct((1, out_w), jnp.float32),
        grid=(num_tiles,),
        in_specs=[
            pl.BlockSpec((tm, D_in), lambda i: (i, 0)),          # x tile: streamed over batch
            pl.BlockSpec((D_in, H), lambda i: (0, 0)),           # encoder weight (resident)
            pl.BlockSpec((1, H), lambda i: (0, 0)),              # encoder bias (resident)
            pl.BlockSpec((1, H), lambda i: (0, 0)),              # decoder weight row (resident)
            pl.BlockSpec(memory_space=pltpu.MemorySpace.SMEM),   # decoder bias scalar
        ],
        out_specs=pl.BlockSpec((1, tm), lambda i: (0, i)),       # lane-dense: batch on lanes
        compiler_params=pltpu.CompilerParams(
            dimension_semantics=("parallel",),                   # shards batch tiles across TCs
            vmem_limit_bytes=vmem_limit,
        ),
        cost_estimate=cost,
    )(x, w1, b1, w2_row, b2)

    return out_row.reshape(out_w, 1)[:B]


def _torch_linear_init(key, fan_in, shape):
    # PyTorch nn.Linear default init: U(-1/sqrt(fan_in), 1/sqrt(fan_in))
    bound = 1.0 / jnp.sqrt(jnp.float32(fan_in))
    return jax.random.uniform(key, shape, jnp.float32, -bound, bound)


if __name__ == "__main__":
    # Small config consistent with the module:
    #   num_items_s = 64  -> input dim = 2 * num_items_s = 128
    #   hidden_size_dis_s = 32, batch = 8
    num_items_s = 64
    hidden_size_dis_s = 32
    batch = 8
    d_in = 2 * num_items_s

    key = jax.random.PRNGKey(0)
    kx, kw1, kb1, kw2, kb2 = jax.random.split(key, 5)

    x = jax.random.normal(kx, (batch, d_in), jnp.float32)
    # encoder_dis_s: Linear(d_in -> hidden), stored as (in, out)
    w1 = _torch_linear_init(kw1, d_in, (d_in, hidden_size_dis_s))
    b1 = _torch_linear_init(kb1, d_in, (1, hidden_size_dis_s))
    # decoder_dis_s: Linear(hidden -> 1); weight kept in PyTorch row layout (1, hidden)
    w2 = _torch_linear_init(kw2, hidden_size_dis_s, (1, hidden_size_dis_s))
    b2 = _torch_linear_init(kb2, hidden_size_dis_s, (1, 1))

    # 1) Tiny-batch path (padded to one 128-row tile), f32 compute: exact vs reference.
    ref = jax.nn.sigmoid(jax.nn.sigmoid(x @ w1 + b1) @ w2.T + b2)
    out = jax.block_until_ready(
        discriminator_s(x, w1, b1, w2, b2, compute_dtype=jnp.float32))
    assert out.shape == (batch, 1)
    assert jnp.allclose(out, ref, atol=1e-5, rtol=1e-5)

    # 2) Multi-tile path with a partial (unpadded) last block, bf16 streaming.
    batch2 = 300
    x2 = jax.random.normal(jax.random.PRNGKey(1), (batch2, d_in), jnp.float32)
    ref2 = jax.nn.sigmoid(jax.nn.sigmoid(x2 @ w1 + b1) @ w2.T + b2)
    out2 = jax.block_until_ready(
        discriminator_s(x2, w1, b1, w2, b2, compute_dtype=jnp.bfloat16, tm_cap=128))
    assert out2.shape == (batch2, 1)
    assert jnp.all(jnp.isfinite(out2))
    assert jnp.allclose(out2, ref2, atol=1e-2, rtol=1e-2)

    # 3) Default (budget-derived tile) path, bf16 streaming.
    batch3 = 2048
    x3 = jax.random.normal(jax.random.PRNGKey(2), (batch3, d_in), jnp.float32)
    ref3 = jax.nn.sigmoid(jax.nn.sigmoid(x3 @ w1 + b1) @ w2.T + b2)
    out3 = jax.block_until_ready(discriminator_s(x3, w1, b1, w2, b2))
    assert out3.shape == (batch3, 1)
    assert jnp.allclose(out3, ref3, atol=1e-2, rtol=1e-2)

    print("KERNEL_OK")
</pallas_src>

<mosaic_0001>
module attributes {stable_mosaic.version = 11 : i64} {
  func.func @discriminator_s_kernel(%arg0: i32, %arg1: memref<128x128xf32, #tpu.memory_space<vmem>>, %arg2: memref<128x32xf32, #tpu.memory_space<vmem>>, %arg3: memref<1x32xf32, #tpu.memory_space<vmem>>, %arg4: memref<1x32xf32, #tpu.memory_space<vmem>>, %arg5: memref<1x1xf32, #tpu.memory_space<smem>>, %arg6: memref<1x128xf32, #tpu.memory_space<vmem>>) attributes {dimension_semantics = [#tpu.dimension_semantics<parallel>], iteration_bounds = array<i64: 1>, scalar_prefetch = 0 : i64, scratch_operands = 0 : i64, tpu.core_type = #tpu.core_type<tc>, window_params = [{transform_indices = @transform_0, window_bounds = array<i64: 128, 128>}, {pipeline_mode = #tpu.pipeline_mode<synchronous>, transform_indices = @transform_1, window_bounds = array<i64: 128, 32>}, {pipeline_mode = #tpu.pipeline_mode<synchronous>, transform_indices = @transform_2, window_bounds = array<i64: 1, 32>}, {pipeline_mode = #tpu.pipeline_mode<synchronous>, transform_indices = @transform_3, window_bounds = array<i64: 1, 32>}, {transform_indices = @transform_4, window_bounds = array<i64: 1, 1>}, {transform_indices = @transform_5, window_bounds = array<i64: 1, 128>}]} {
    %c0 = arith.constant 0 : index
    %c0_0 = arith.constant 0 : index
    %0 = vector.load %arg1[%c0, %c0_0] : memref<128x128xf32, #tpu.memory_space<vmem>>, vector<128x128xf32>
    %c0_1 = arith.constant 0 : index
    %c0_2 = arith.constant 0 : index
    %1 = vector.load %arg2[%c0_1, %c0_2] : memref<128x32xf32, #tpu.memory_space<vmem>>, vector<128x32xf32>
    %cst = arith.constant dense<0.000000e+00> : vector<128x32xf32>
    %2 = tpu.matmul %0, %1, %cst {dimension_numbers = #tpu.dot_dimension_numbers<[1], [0], [0], [1], [0, 0, 1, 1], [], []>} : vector<128x128xf32>, vector<128x32xf32>, vector<128x32xf32> -> vector<128x32xf32>
    %c0_3 = arith.constant 0 : index
    %c0_4 = arith.constant 0 : index
    %3 = vector.load %arg3[%c0_3, %c0_4] : memref<1x32xf32, #tpu.memory_space<vmem>>, vector<1x32xf32>
    %4 = vector.broadcast %3 : vector<1x32xf32> to vector<128x32xf32>
    %5 = arith.addf %2, %4 : vector<128x32xf32>
    %6 = arith.negf %5 : vector<128x32xf32>
    %7 = math.exp %6 : vector<128x32xf32>
    %cst_5 = arith.constant 1.000000e+00 : f32
    %8 = vector.broadcast %cst_5 : f32 to vector<128x32xf32>
    %9 = arith.addf %8, %7 : vector<128x32xf32>
    %10 = arith.divf %8, %9 : vector<128x32xf32>
    %c0_6 = arith.constant 0 : index
    %c0_7 = arith.constant 0 : index
    %11 = vector.load %arg4[%c0_6, %c0_7] : memref<1x32xf32, #tpu.memory_space<vmem>>, vector<1x32xf32>
    %12 = vector.broadcast %11 : vector<1x32xf32> to vector<128x32xf32>
    %13 = arith.mulf %10, %12 : vector<128x32xf32>
    %cst_8 = arith.constant dense<0.000000e+00> : vector<128xf32>
    %14 = vector.multi_reduction <add>, %13, %cst_8 [1] : vector<128x32xf32> to vector<128xf32>
    %c0_9 = arith.constant 0 : index
    %c0_10 = arith.constant 0 : index
    %15 = memref.load %arg5[%c0_9, %c0_10] : memref<1x1xf32, #tpu.memory_space<smem>>
    %16 = vector.broadcast %15 : f32 to vector<128xf32>
    %17 = arith.addf %14, %16 : vector<128xf32>
    %18 = arith.negf %17 : vector<128xf32>
    %19 = math.exp %18 : vector<128xf32>
    %cst_11 = arith.constant 1.000000e+00 : f32
    %20 = vector.broadcast %cst_11 : f32 to vector<128xf32>
    %21 = arith.addf %20, %19 : vector<128xf32>
    %22 = arith.divf %20, %21 : vector<128xf32>
    %23 = vector.shape_cast %22 : vector<128xf32> to vector<1x128xf32>
    %c0_12 = arith.constant 0 : index
    %c0_13 = arith.constant 0 : index
    %24 = vector.load %arg6[%c0_12, %c0_13] : memref<1x128xf32, #tpu.memory_space<vmem>>, vector<1x128xf32>
    tpu.vector_store %arg6[%c0_12, %c0_13], %23 {strides = array<i32>} : memref<1x128xf32, #tpu.memory_space<vmem>>, vector<1x128xf32>,
    return
  }
  func.func @transform_0(%arg0: i32) -> (i32, i32) {
    %c0_i32 = arith.constant 0 : i32
    %c0_i32_0 = arith.constant 0 : i32
    return %arg0, %c0_i32 : i32, i32
  }
  func.func @transform_1(%arg0: i32) -> (i32, i32) {
    %c0_i32 = arith.constant 0 : i32
    %c0_i32_0 = arith.constant 0 : i32
    %c0_i32_1 = arith.constant 0 : i32
    return %c0_i32, %c0_i32_0 : i32, i32
  }
  func.func @transform_2(%arg0: i32) -> (i32, i32) {
    %c0_i32 = arith.constant 0 : i32
    %c0_i32_0 = arith.constant 0 : i32
    %c0_i32_1 = arith.constant 0 : i32
    return %c0_i32, %c0_i32_0 : i32, i32
  }
  func.func @transform_3(%arg0: i32) -> (i32, i32) {
    %c0_i32 = arith.constant 0 : i32
    %c0_i32_0 = arith.constant 0 : i32
    %c0_i32_1 = arith.constant 0 : i32
    return %c0_i32, %c0_i32_0 : i32, i32
  }
  func.func @transform_4(%arg0: i32) -> (i32, i32) {
    %c0_i32 = arith.constant 0 : i32
    %c0_i32_0 = arith.constant 0 : i32
    %c0_i32_1 = arith.constant 0 : i32
    return %c0_i32, %c0_i32_0 : i32, i32
  }
  func.func @transform_5(%arg0: i32) -> (i32, i32) {
    %c0_i32 = arith.constant 0 : i32
    %c0_i32_0 = arith.constant 0 : i32
    return %c0_i32, %arg0 : i32, i32
  }
}

</mosaic_0001>

<llo_original>
// kernel: tpu_custom_call.1
$region0: #{tpu_custom_call.1}
  #allocation0 [shape = 'u32[]', space=smem, size = 0x4, offset = 0x4, fixed_abs, tag = 'smem constant byte address 0x4 - core index']
  #allocation1 [shape = 'u32[144,128]{1,0:T(1,128)}', space=vmem, size = 0x12000, scoped, tag = 'internal scratch']
  #allocation2 [shape = 'f32[1,1]{1,0:T(1,128)S(6)}', space=smem, size = 0x200, scoped, tag = 'scoped memory for tpu_custom_call.1']
  %s0 = inlined_call_operand.vmem [shape: f32[128,128], index: 0, kind: input, shape index: {}]
  %s1 = inlined_call_operand.vmem [shape: f32[128,32], index: 1, kind: input, shape index: {}]
  %s2 = inlined_call_operand.vmem [shape: f32[1,32], index: 2, kind: input, shape index: {}]
  %s3 = inlined_call_operand.vmem [shape: f32[1,32], index: 3, kind: input, shape index: {}]
  %s4 = inlined_call_operand.<no memory space> [shape: f32[1,1], index: 4, kind: input, shape index: {}]
  %s5 = inlined_call_operand.hbm [shape: f32[1,128], index: 5, kind: output, shape index: {}]
  %s6 = sld [smem:[#allocation0]]
  $region30: #{tpu_custom_call.1} parent=0
    _
  %s8 = ssub.s32 1, %s6
  %s9 = scalar_select 0, %s8, %s6
  %10 = sst [smem:[#allocation2]] %s4
  $region1: #{tpu_custom_call.1} parent=0
    #allocation3 [shape = 'u8[512]{0}', space=vmem, size = 0x400, scoped, tag = 'output window, operand 0, single buffered']
    #allocation4 [shape = 's32[1]{0}', space=sflag, size = 0x4, scoped, tag = 'scoped memory for tpu_custom_call.1']
    %11 = vsyncpa [#allocation4], 0
    // Predicated region
    $region2: #{tpu_custom_call.1} parent=1 // pred_check
      _
    $region3: #{tpu_custom_call.1} parent=1 // pred_check_branch
      %13 = sbr.rel (0) target = $region5
    $region4: #{tpu_custom_call.1} parent=1 // pred_region
      _
    $region5: #{tpu_custom_call.1} parent=1 // pred_fallthru
      _
    // Predicated region
    $region6: #{tpu_custom_call.1} parent=1 // pred_check
      _
    $region7: #{tpu_custom_call.1} parent=1 // pred_check_branch
      %15 = sbr.rel (0) target = $region9
    $region8: #{tpu_custom_call.1} parent=1 // pred_region
      _
    $region9: #{tpu_custom_call.1} parent=1 // pred_fallthru
      _
    // Predicated region
    $region10: #{tpu_custom_call.1} parent=1 // pred_check
      _
    $region11: #{tpu_custom_call.1} parent=1 // pred_check_branch
      %17 = sbr.rel (0) target = $region13
    $region12: #{tpu_custom_call.1} parent=1 // pred_region
      _
    $region13: #{tpu_custom_call.1} parent=1 // pred_fallthru
      _
    // Predicated region
    $region14: #{tpu_custom_call.1} parent=1 // pred_check
      _
    $region15: #{tpu_custom_call.1} parent=1 // pred_check_branch
      %19 = sbr.rel (0) target = $region17
    $region16: #{tpu_custom_call.1} parent=1 // pred_region
      _
    $region17: #{tpu_custom_call.1} parent=1 // pred_fallthru
      _
    // Predicated region
    $region18: #{tpu_custom_call.1} parent=1 // pred_check
      _
    $region19: #{tpu_custom_call.1} parent=1 // pred_check_branch
      %21 = sbr.rel (0) target = $region21
    $region20: #{tpu_custom_call.1} parent=1 // pred_region
      _
    $region21: #{tpu_custom_call.1} parent=1 // pred_fallthru
      _
    %v22 = vld [vmem:[%s0] sm:$0xff]
    %v23 = vld [vmem:[%s0 + $0x8] sm:$0xff]
    %v24 = vld [vmem:[%s0 + $0x10] sm:$0xff]
    %v25 = vld [vmem:[%s0 + $0x18] sm:$0xff]
    %v26 = vld [vmem:[%s0 + $0x20] sm:$0xff]
    %v27 = vld [vmem:[%s0 + $0x28] sm:$0xff]
    %v28 = vld [vmem:[%s0 + $0x30] sm:$0xff]
    %v29 = vld [vmem:[%s0 + $0x38] sm:$0xff]
    %v30 = vld [vmem:[%s0 + $0x40] sm:$0xff]
    %v31 = vld [vmem:[%s0 + $0x48] sm:$0xff]
    %v32 = vld [vmem:[%s0 + $0x50] sm:$0xff]
    %v33 = vld [vmem:[%s0 + $0x58] sm:$0xff]
    %v34 = vld [vmem:[%s0 + $0x60] sm:$0xff]
    %v35 = vld [vmem:[%s0 + $0x68] sm:$0xff]
    %v36 = vld [vmem:[%s0 + $0x70] sm:$0xff]
    %v37 = vld [vmem:[%s0 + $0x78] sm:$0xff]
    %v38 = vld [vmem:[%s1] sm:$0xff]
    %v39 = vld [vmem:[%s1 + $0x8] sm:$0xff]
    %v40 = vld [vmem:[%s1 + $0x10] sm:$0xff]
    %v41 = vld [vmem:[%s1 + $0x18] sm:$0xff]
    %v42 = vld [vmem:[%s1 + $0x20] sm:$0xff]
    %v43 = vld [vmem:[%s1 + $0x28] sm:$0xff]
    %v44 = vld [vmem:[%s1 + $0x30] sm:$0xff]
    %v45 = vld [vmem:[%s1 + $0x38] sm:$0xff]
    %v46 = vld [vmem:[%s1 + $0x40] sm:$0xff]
    %v47 = vld [vmem:[%s1 + $0x48] sm:$0xff]
    %v48 = vld [vmem:[%s1 + $0x50] sm:$0xff]
    %v49 = vld [vmem:[%s1 + $0x58] sm:$0xff]
    %v50 = vld [vmem:[%s1 + $0x60] sm:$0xff]
    %v51 = vld [vmem:[%s1 + $0x68] sm:$0xff]
    %v52 = vld [vmem:[%s1 + $0x70] sm:$0xff]
    %v53 = vld [vmem:[%s1 + $0x78] sm:$0xff]
    %v54 = vld [vmem:[%s2] sm:$0x1]
    %v56 = vlaneseq
    %v57 = vshrl.u32 %v56, 7
    %v58 = vsub.s32 0, %v57
    %v59 = vrot.slane %v54, %v58
    %61 = vmatprep.subr.mxu0 0.0
    %62 = vmatpush1.msra.mxu0 %v53
    %63 = vmatprep.subr.mxu0 0.0
    %64 = vmatpush1.msra.mxu0 %v52
    %65 = vmatprep.subr.mxu0 0.0
    %66 = vmatpush1.msra.mxu0 %v51
    %67 = vmatprep.subr.mxu0 0.0
    %68 = vmatpush1.msra.mxu0 %v50
    %69 = vmatprep.subr.mxu0 0.0
    %70 = vmatpush1.msra.mxu0 %v49
    %71 = vmatprep.subr.mxu0 0.0
    %72 = vmatpush1.msra.mxu0 %v48
    %73 = vmatprep.subr.mxu0 0.0
    %74 = vmatpush1.msra.mxu0 %v47
    %75 = vmatprep.subr.mxu0 0.0
    %76 = vmatpush1.msra.mxu0 %v46
    %77 = vmatprep.subr.mxu0 0.0
    %78 = vmatpush1.msra.mxu0 %v45
    %79 = vmatprep.subr.mxu0 0.0
    %80 = vmatpush1.msra.mxu0 %v44
    %81 = vmatprep.subr.mxu0 0.0
    %82 = vmatpush1.msra.mxu0 %v43
    %83 = vmatprep.subr.mxu0 0.0
    %84 = vmatpush1.msra.mxu0 %v42
    %85 = vmatprep.subr.mxu0 0.0
    %86 = vmatpush1.msra.mxu0 %v41
    %87 = vmatprep.subr.mxu0 0.0
    %88 = vmatpush1.msra.mxu0 %v40
    %89 = vmatprep.subr.mxu0 0.0
    %90 = vmatpush1.msra.mxu0 %v39
    %91 = vmatprep.subr.mxu0 0.0
    %92 = vmatpush1.msra.mxu0 %v38
    %93 = vmatprep.subr.mxu0 0.0
    %94 = vmatpush2.msra.mxu0 0.0
    %95 = vmatprep.subr.mxu0 0.0
    %96 = vmatpush2.msra.mxu0 0.0
    %97 = vmatprep.subr.mxu0 0.0
    %98 = vmatpush2.msra.mxu0 0.0
    %99 = vmatprep.subr.mxu0 0.0
    %100 = vmatpush2.msra.mxu0 0.0
    %101 = vmatprep.subr.mxu0 0.0
    %102 = vmatpush2.msra.mxu0 0.0
    %103 = vmatprep.subr.mxu0 0.0
    %104 = vmatpush2.msra.mxu0 0.0
    %105 = vmatprep.subr.mxu0 0.0
    %106 = vmatpush2.msra.mxu0 0.0
    %107 = vmatprep.subr.mxu0 0.0
    %108 = vmatpush2.msra.mxu0 0.0
    %109 = vmatprep.subr.mxu0 0.0
    %110 = vmatpush2.msra.mxu0 0.0
    %111 = vmatprep.subr.mxu0 0.0
    %112 = vmatpush2.msra.mxu0 0.0
    %113 = vmatprep.subr.mxu0 0.0
    %114 = vmatpush2.msra.mxu0 0.0
    %115 = vmatprep.subr.mxu0 0.0
    %116 = vmatpush2.msra.mxu0 0.0
    %117 = vmatprep.subr.mxu0 0.0
    %118 = vmatpush2.msra.mxu0 0.0
    %119 = vmatprep.subr.mxu0 0.0
    %120 = vmatpush2.msra.mxu0 0.0
    %121 = vmatprep.subr.mxu0 0.0
    %122 = vmatpush2.msra.mxu0 0.0
    %123 = vmatprep.subr.mxu0 0.0
    %124 = vmatpush2.msra.mxu0 0.0
    %125 = vmatprep.mubr.f32.mxu0 0.0
    %126 = vmatmul.mubr.f32.gmra.mxu0 %v22
    %v127 = vpop.f32.mrf.mxu0
    %v128 = vadd.f32 %v59, %v127
    %v129 = vpop.f32.mrf.mxu0
    %130 = vmatprep.mubr.f32.mxu0 0.0
    %131 = vmatmul.mubr.f32.gmra.mxu0 %v23
    %v132 = vpop.f32.mrf.mxu0
    %v133 = vadd.f32 %v59, %v132
    %v134 = vpop.f32.mrf.mxu0
    %135 = vmatprep.mubr.f32.mxu0 0.0
    %136 = vmatmul.mubr.f32.gmra.mxu0 %v24
    %v137 = vpop.f32.mrf.mxu0
    %v138 = vadd.f32 %v59, %v137
    %v139 = vpop.f32.mrf.mxu0
    %140 = vmatprep.mubr.f32.mxu0 0.0
    %141 = vmatmul.mubr.f32.gmra.mxu0 %v25
    %v142 = vpop.f32.mrf.mxu0
    %v143 = vadd.f32 %v59, %v142
    %v144 = vpop.f32.mrf.mxu0
    %145 = vmatprep.mubr.f32.mxu0 0.0
    %146 = vmatmul.mubr.f32.gmra.mxu0 %v26
    %v147 = vpop.f32.mrf.mxu0
    %v148 = vadd.f32 %v59, %v147
    %v149 = vpop.f32.mrf.mxu0
    %150 = vmatprep.mubr.f32.mxu0 0.0
    %151 = vmatmul.mubr.f32.gmra.mxu0 %v27
    %v152 = vpop.f32.mrf.mxu0
    %v153 = vadd.f32 %v59, %v152
    %v154 = vpop.f32.mrf.mxu0
    %155 = vmatprep.mubr.f32.mxu0 0.0
    %156 = vmatmul.mubr.f32.gmra.mxu0 %v28
    %v157 = vpop.f32.mrf.mxu0
    %v158 = vadd.f32 %v59, %v157
    %v159 = vpop.f32.mrf.mxu0
    %160 = vmatprep.mubr.f32.mxu0 0.0
    %161 = vmatmul.mubr.f32.gmra.mxu0 %v29
    %v162 = vpop.f32.mrf.mxu0
    %v163 = vadd.f32 %v59, %v162
    %v164 = vpop.f32.mrf.mxu0
    %165 = vmatprep.mubr.f32.mxu0 0.0
    %166 = vmatmul.mubr.f32.gmra.mxu0 %v30
    %v167 = vpop.f32.mrf.mxu0
    %v168 = vadd.f32 %v59, %v167
    %v169 = vpop.f32.mrf.mxu0
    %170 = vmatprep.mubr.f32.mxu0 0.0
    %171 = vmatmul.mubr.f32.gmra.mxu0 %v31
    %v172 = vpop.f32.mrf.mxu0
    %v173 = vadd.f32 %v59, %v172
    %v174 = vpop.f32.mrf.mxu0
    %175 = vmatprep.mubr.f32.mxu0 0.0
    %176 = vmatmul.mubr.f32.gmra.mxu0 %v32
    %v177 = vpop.f32.mrf.mxu0
    %v178 = vadd.f32 %v59, %v177
    %v179 = vpop.f32.mrf.mxu0
    %180 = vmatprep.mubr.f32.mxu0 0.0
    %181 = vmatmul.mubr.f32.gmra.mxu0 %v33
    %v182 = vpop.f32.mrf.mxu0
    %v183 = vadd.f32 %v59, %v182
    %v184 = vpop.f32.mrf.mxu0
    %185 = vmatprep.mubr.f32.mxu0 0.0
    %186 = vmatmul.mubr.f32.gmra.mxu0 %v34
    %v187 = vpop.f32.mrf.mxu0
    %v188 = vadd.f32 %v59, %v187
    %v189 = vpop.f32.mrf.mxu0
    %190 = vmatprep.mubr.f32.mxu0 0.0
    %191 = vmatmul.mubr.f32.gmra.mxu0 %v35
    %v192 = vpop.f32.mrf.mxu0
    %v193 = vadd.f32 %v59, %v192
    %v194 = vpop.f32.mrf.mxu0
    %195 = vmatprep.mubr.f32.mxu0 0.0
    %196 = vmatmul.mubr.f32.gmra.mxu0 %v36
    %v197 = vpop.f32.mrf.mxu0
    %v198 = vadd.f32 %v59, %v197
    %v199 = vpop.f32.mrf.mxu0
    %200 = vmatprep.mubr.f32.mxu0 0.0
    %201 = vmatmul.mubr.f32.gmra.mxu0 %v37
    %v202 = vpop.f32.mrf.mxu0
    %v203 = vadd.f32 %v59, %v202
    %v204 = vpop.f32.mrf.mxu0
    %205 = vdwg.mxu0
    %v206 = vxor.u32 %v128, 2147483648
    %v207 = vxor.u32 %v133, 2147483648
    %v208 = vxor.u32 %v138, 2147483648
    %v209 = vxor.u32 %v143, 2147483648
    %v210 = vxor.u32 %v148, 2147483648
    %v211 = vxor.u32 %v153, 2147483648
    %v212 = vxor.u32 %v158, 2147483648
    %v213 = vxor.u32 %v163, 2147483648
    %v214 = vxor.u32 %v168, 2147483648
    %v215 = vxor.u32 %v173, 2147483648
    %v216 = vxor.u32 %v178, 2147483648
    %v217 = vxor.u32 %v183, 2147483648
    %v218 = vxor.u32 %v188, 2147483648
    %v219 = vxor.u32 %v193, 2147483648
    %v220 = vxor.u32 %v198, 2147483648
    %v221 = vxor.u32 %v203, 2147483648
    %v222 = vmul.f32 %v206, 1.442695
    %v223 = vpow.pop %v222
    %v224 = vmul.f32 %v207, 1.442695
    %v225 = vpow.pop %v224
    %v226 = vmul.f32 %v208, 1.442695
    %v227 = vpow.pop %v226
    %v228 = vmul.f32 %v209, 1.442695
    %v229 = vpow.pop %v228
    %v230 = vmul.f32 %v210, 1.442695
    %v231 = vpow.pop %v230
    %v232 = vmul.f32 %v211, 1.442695
    %v233 = vpow.pop %v232
    %v234 = vmul.f32 %v212, 1.442695
    %v235 = vpow.pop %v234
    %v236 = vmul.f32 %v213, 1.442695
    %v237 = vpow.pop %v236
    %v238 = vmul.f32 %v214, 1.442695
    %v239 = vpow.pop %v238
    %v240 = vmul.f32 %v215, 1.442695
    %v241 = vpow.pop %v240
    %v242 = vmul.f32 %v216, 1.442695
    %v243 = vpow.pop %v242
    %v244 = vmul.f32 %v217, 1.442695
    %v245 = vpow.pop %v244
    %v246 = vmul.f32 %v218, 1.442695
    %v247 = vpow.pop %v246
    %v248 = vmul.f32 %v219, 1.442695
    %v249 = vpow.pop %v248
    %v250 = vmul.f32 %v220, 1.442695
    %v251 = vpow.pop %v250
    %v252 = vmul.f32 %v221, 1.442695
    %v253 = vpow.pop %v252
    %v254 = vadd.f32 %v223, 1.0
    %v255 = vadd.f32 %v225, 1.0
    %v256 = vadd.f32 %v227, 1.0
    %v257 = vadd.f32 %v229, 1.0
    %v258 = vadd.f32 %v231, 1.0
    %v259 = vadd.f32 %v233, 1.0
    %v260 = vadd.f32 %v235, 1.0
    %v261 = vadd.f32 %v237, 1.0
    %v262 = vadd.f32 %v239, 1.0
    %v263 = vadd.f32 %v241, 1.0
    %v264 = vadd.f32 %v243, 1.0
    %v265 = vadd.f32 %v245, 1.0
    %v266 = vadd.f32 %v247, 1.0
    %v267 = vadd.f32 %v249, 1.0
    %v268 = vadd.f32 %v251, 1.0
    %v269 = vadd.f32 %v253, 1.0
    %v270 = vrcp.pop %v254
    %v271 = vmul.f32 1.0, %v270
    %v272 = vrcp.pop %v255
    %v273 = vmul.f32 1.0, %v272
    %v274 = vrcp.pop %v256
    %v275 = vmul.f32 1.0, %v274
    %v276 = vrcp.pop %v257
    %v277 = vmul.f32 1.0, %v276
    %v278 = vrcp.pop %v258
    %v279 = vmul.f32 1.0, %v278
    %v280 = vrcp.pop %v259
    %v281 = vmul.f32 1.0, %v280
    %v282 = vrcp.pop %v260
    %v283 = vmul.f32 1.0, %v282
    %v284 = vrcp.pop %v261
    %v285 = vmul.f32 1.0, %v284
    %v286 = vrcp.pop %v262
    %v287 = vmul.f32 1.0, %v286
    %v288 = vrcp.pop %v263
    %v289 = vmul.f32 1.0, %v288
    %v290 = vrcp.pop %v264
    %v291 = vmul.f32 1.0, %v290
    %v292 = vrcp.pop %v265
    %v293 = vmul.f32 1.0, %v292
    %v294 = vrcp.pop %v266
    %v295 = vmul.f32 1.0, %v294
    %v296 = vrcp.pop %v267
    %v297 = vmul.f32 1.0, %v296
    %v298 = vrcp.pop %v268
    %v299 = vmul.f32 1.0, %v298
    %v300 = vrcp.pop %v269
    %v301 = vmul.f32 1.0, %v300
    %v302 = vld [vmem:[%s3] sm:$0x1]
    %v304 = vlaneseq
    %v305 = vshrl.u32 %v304, 7
    %v306 = vsub.s32 0, %v305
    %v307 = vrot.slane %v302, %v306
    %v309 = vmul.f32 %v271, %v307
    %v310 = vmul.f32 %v273, %v307
    %v311 = vmul.f32 %v275, %v307
    %v312 = vmul.f32 %v277, %v307
    %v313 = vmul.f32 %v279, %v307
    %v314 = vmul.f32 %v281, %v307
    %v315 = vmul.f32 %v283, %v307
    %v316 = vmul.f32 %v285, %v307
    %v317 = vmul.f32 %v287, %v307
    %v318 = vmul.f32 %v289, %v307
    %v319 = vmul.f32 %v291, %v307
    %v320 = vmul.f32 %v293, %v307
    %v321 = vmul.f32 %v295, %v307
    %v322 = vmul.f32 %v297, %v307
    %v323 = vmul.f32 %v299, %v307
    %v324 = vmul.f32 %v301, %v307
    %vm325 = vcmask 261120
    %v326 = vsel %vm325, %v309, 0.0
    %327 = vadd.xlane.f32.xlu0 %v326
    %v328 = vpop.xlane.xlu0 %327
    %v329 = vsel %vm325, %v310, 0.0
    %330 = vadd.xlane.f32.xlu0 %v329
    %v331 = vpop.xlane.xlu0 %330
    %v332 = vsel %vm325, %v311, 0.0
    %333 = vadd.xlane.f32.xlu0 %v332
    %v334 = vpop.xlane.xlu0 %333
    %v335 = vsel %vm325, %v312, 0.0
    %336 = vadd.xlane.f32.xlu0 %v335
    %v337 = vpop.xlane.xlu0 %336
    %v338 = vsel %vm325, %v313, 0.0
    %339 = vadd.xlane.f32.xlu0 %v338
    %v340 = vpop.xlane.xlu0 %339
    %v341 = vsel %vm325, %v314, 0.0
    %342 = vadd.xlane.f32.xlu0 %v341
    %v343 = vpop.xlane.xlu0 %342
    %v344 = vsel %vm325, %v315, 0.0
    %345 = vadd.xlane.f32.xlu0 %v344
    %v346 = vpop.xlane.xlu0 %345
    %v347 = vsel %vm325, %v316, 0.0
    %348 = vadd.xlane.f32.xlu0 %v347
    %v349 = vpop.xlane.xlu0 %348
    %v350 = vsel %vm325, %v317, 0.0
    %351 = vadd.xlane.f32.xlu0 %v350
    %v352 = vpop.xlane.xlu0 %351
    %v353 = vsel %vm325, %v318, 0.0
    %354 = vadd.xlane.f32.xlu0 %v353
    %v355 = vpop.xlane.xlu0 %354
    %v356 = vsel %vm325, %v319, 0.0
    %357 = vadd.xlane.f32.xlu0 %v356
    %v358 = vpop.xlane.xlu0 %357
    %v359 = vsel %vm325, %v320, 0.0
    %360 = vadd.xlane.f32.xlu0 %v359
    %v361 = vpop.xlane.xlu0 %360
    %v362 = vsel %vm325, %v321, 0.0
    %363 = vadd.xlane.f32.xlu0 %v362
    %v364 = vpop.xlane.xlu0 %363
    %v365 = vsel %vm325, %v322, 0.0
    %366 = vadd.xlane.f32.xlu0 %v365
    %v367 = vpop.xlane.xlu0 %366
    %v368 = vsel %vm325, %v323, 0.0
    %369 = vadd.xlane.f32.xlu0 %v368
    %v370 = vpop.xlane.xlu0 %369
    %v371 = vsel %vm325, %v324, 0.0
    %372 = vadd.xlane.f32.xlu0 %v371
    %v373 = vpop.xlane.xlu0 %372
    %s374 = sld [smem:[#allocation2]]
    %v375 = vstv %s374
    %v376 = vadd.f32 %v328, %v375
    %v377 = vadd.f32 %v331, %v375
    %v378 = vadd.f32 %v334, %v375
    %v379 = vadd.f32 %v337, %v375
    %v380 = vadd.f32 %v340, %v375
    %v381 = vadd.f32 %v343, %v375
    %v382 = vadd.f32 %v346, %v375
    %v383 = vadd.f32 %v349, %v375
    %v384 = vadd.f32 %v352, %v375
    %v385 = vadd.f32 %v355, %v375
    %v386 = vadd.f32 %v358, %v375
    %v387 = vadd.f32 %v361, %v375
    %v388 = vadd.f32 %v364, %v375
    %v389 = vadd.f32 %v367, %v375
    %v390 = vadd.f32 %v370, %v375
    %v391 = vadd.f32 %v373, %v375
    %v392 = vxor.u32 %v376, 2147483648
    %v393 = vxor.u32 %v377, 2147483648
    %v394 = vxor.u32 %v378, 2147483648
    %v395 = vxor.u32 %v379, 2147483648
    %v396 = vxor.u32 %v380, 2147483648
    %v397 = vxor.u32 %v381, 2147483648
    %v398 = vxor.u32 %v382, 2147483648
    %v399 = vxor.u32 %v383, 2147483648
    %v400 = vxor.u32 %v384, 2147483648
    %v401 = vxor.u32 %v385, 2147483648
    %v402 = vxor.u32 %v386, 2147483648
    %v403 = vxor.u32 %v387, 2147483648
    %v404 = vxor.u32 %v388, 2147483648
    %v405 = vxor.u32 %v389, 2147483648
    %v406 = vxor.u32 %v390, 2147483648
    %v407 = vxor.u32 %v391, 2147483648
    %v408 = vmul.f32 %v392, 1.442695
    %v409 = vpow.pop %v408
    %v410 = vmul.f32 %v393, 1.442695
    %v411 = vpow.pop %v410
    %v412 = vmul.f32 %v394, 1.442695
    %v413 = vpow.pop %v412
    %v414 = vmul.f32 %v395, 1.442695
    %v415 = vpow.pop %v414
    %v416 = vmul.f32 %v396, 1.442695
    %v417 = vpow.pop %v416
    %v418 = vmul.f32 %v397, 1.442695
    %v419 = vpow.pop %v418
    %v420 = vmul.f32 %v398, 1.442695
    %v421 = vpow.pop %v420
    %v422 = vmul.f32 %v399, 1.442695
    %v423 = vpow.pop %v422
    %v424 = vmul.f32 %v400, 1.442695
    %v425 = vpow.pop %v424
    %v426 = vmul.f32 %v401, 1.442695
    %v427 = vpow.pop %v426
    %v428 = vmul.f32 %v402, 1.442695
    %v429 = vpow.pop %v428
    %v430 = vmul.f32 %v403, 1.442695
    %v431 = vpow.pop %v430
    %v432 = vmul.f32 %v404, 1.442695
    %v433 = vpow.pop %v432
    %v434 = vmul.f32 %v405, 1.442695
    %v435 = vpow.pop %v434
    %v436 = vmul.f32 %v406, 1.442695
    %v437 = vpow.pop %v436
    %v438 = vmul.f32 %v407, 1.442695
    %v439 = vpow.pop %v438
    %v440 = vadd.f32 %v409, 1.0
    %v441 = vadd.f32 %v411, 1.0
    %v442 = vadd.f32 %v413, 1.0
    %v443 = vadd.f32 %v415, 1.0
    %v444 = vadd.f32 %v417, 1.0
    %v445 = vadd.f32 %v419, 1.0
    %v446 = vadd.f32 %v421, 1.0
    %v447 = vadd.f32 %v423, 1.0
    %v448 = vadd.f32 %v425, 1.0
    %v449 = vadd.f32 %v427, 1.0
    %v450 = vadd.f32 %v429, 1.0
    %v451 = vadd.f32 %v431, 1.0
    %v452 = vadd.f32 %v433, 1.0
    %v453 = vadd.f32 %v435, 1.0
    %v454 = vadd.f32 %v437, 1.0
    %v455 = vadd.f32 %v439, 1.0
    %v456 = vrcp.pop %v440
    %v457 = vmul.f32 1.0, %v456
    %v458 = vrcp.pop %v441
    %v459 = vmul.f32 1.0, %v458
    %v460 = vrcp.pop %v442
    %v461 = vmul.f32 1.0, %v460
    %v462 = vrcp.pop %v443
    %v463 = vmul.f32 1.0, %v462
    %v464 = vrcp.pop %v444
    %v465 = vmul.f32 1.0, %v464
    %v466 = vrcp.pop %v445
    %v467 = vmul.f32 1.0, %v466
    %v468 = vrcp.pop %v446
    %v469 = vmul.f32 1.0, %v468
    %v470 = vrcp.pop %v447
    %v471 = vmul.f32 1.0, %v470
    %v472 = vrcp.pop %v448
    %v473 = vmul.f32 1.0, %v472
    %v474 = vrcp.pop %v449
    %v475 = vmul.f32 1.0, %v474
    %v476 = vrcp.pop %v450
    %v477 = vmul.f32 1.0, %v476
    %v478 = vrcp.pop %v451
    %v479 = vmul.f32 1.0, %v478
    %v480 = vrcp.pop %v452
    %v481 = vmul.f32 1.0, %v480
    %v482 = vrcp.pop %v453
    %v483 = vmul.f32 1.0, %v482
    %v484 = vrcp.pop %v454
    %v485 = vmul.f32 1.0, %v484
    %v486 = vrcp.pop %v455
    %v487 = vmul.f32 1.0, %v486
    %v504 = vlaneseq
    %v505 = vand.u32 %v504, 127
    %v506 = vlaneseq
    %v507 = vshrl.u32 %v506, 7
    %v508 = vsub.s32 %v505, %v507
    %v509 = vrot.slane %v457, %v508
    %v510 = vadd.s32 %v505, 4294967288
    %v511 = vlaneseq
    %v512 = vshrl.u32 %v511, 7
    %v513 = vsub.s32 %v510, %v512
    %v514 = vrot.slane %v459, %v513
    %vm515 = vcmask 130112
    %v516 = vsel %vm515, %v514, %v509
    %v517 = vadd.s32 %v505, 4294967280
    %v518 = vlaneseq
    %v519 = vshrl.u32 %v518, 7
    %v520 = vsub.s32 %v517, %v519
    %v521 = vrot.slane %v461, %v520
    %vm522 = vcmask 195712
    %v523 = vsel %vm522, %v521, %v516
    %v524 = vadd.s32 %v505, 4294967272
    %v525 = vlaneseq
    %v526 = vshrl.u32 %v525, 7
    %v527 = vsub.s32 %v524, %v526
    %v528 = vrot.slane %v463, %v527
    %vm529 = vcmask 261312
    %v530 = vsel %vm529, %v528, %v523
    %v531 = vadd.s32 %v505, 4294967264
    %v532 = vlaneseq
    %v533 = vshrl.u32 %v532, 7
    %v534 = vsub.s32 %v531, %v533
    %v535 = vrot.slane %v465, %v534
    %vm536 = vcmask 326912
    %v537 = vsel %vm536, %v535, %v530
    %v538 = vadd.s32 %v505, 4294967256
    %v539 = vlaneseq
    %v540 = vshrl.u32 %v539, 7
    %v541 = vsub.s32 %v538, %v540
    %v542 = vrot.slane %v467, %v541
    %vm543 = vcmask 392512
    %v544 = vsel %vm543, %v542, %v537
    %v545 = vadd.s32 %v505, 4294967248
    %v546 = vlaneseq
    %v547 = vshrl.u32 %v546, 7
    %v548 = vsub.s32 %v545, %v547
    %v549 = vrot.slane %v469, %v548
    %vm550 = vcmask 458112
    %v551 = vsel %vm550, %v549, %v544
    %v552 = vadd.s32 %v505, 4294967240
    %v553 = vlaneseq
    %v554 = vshrl.u32 %v553, 7
    %v555 = vsub.s32 %v552, %v554
    %v556 = vrot.slane %v471, %v555
    %vm557 = vcmask 523712
    %v558 = vsel %vm557, %v556, %v551
    %v559 = vadd.s32 %v505, 4294967232
    %v560 = vlaneseq
    %v561 = vshrl.u32 %v560, 7
    %v562 = vsub.s32 %v559, %v561
    %v563 = vrot.slane %v473, %v562
    %vm564 = vcmask 589312
    %v565 = vsel %vm564, %v563, %v558
    %v566 = vadd.s32 %v505, 4294967224
    %v567 = vlaneseq
    %v568 = vshrl.u32 %v567, 7
    %v569 = vsub.s32 %v566, %v568
    %v570 = vrot.slane %v475, %v569
    %vm571 = vcmask 654912
    %v572 = vsel %vm571, %v570, %v565
    %v573 = vadd.s32 %v505, 4294967216
    %v574 = vlaneseq
    %v575 = vshrl.u32 %v574, 7
    %v576 = vsub.s32 %v573, %v575
    %v577 = vrot.slane %v477, %v576
    %vm578 = vcmask 720512
    %v579 = vsel %vm578, %v577, %v572
    %v580 = vadd.s32 %v505, 4294967208
    %v581 = vlaneseq
    %v582 = vshrl.u32 %v581, 7
    %v583 = vsub.s32 %v580, %v582
    %v584 = vrot.slane %v479, %v583
    %vm585 = vcmask 786112
    %v586 = vsel %vm585, %v584, %v579
    %v587 = vadd.s32 %v505, 4294967200
    %v588 = vlaneseq
    %v589 = vshrl.u32 %v588, 7
    %v590 = vsub.s32 %v587, %v589
    %v591 = vrot.slane %v481, %v590
    %vm592 = vcmask 851712
    %v593 = vsel %vm592, %v591, %v586
    %v594 = vadd.s32 %v505, 4294967192
    %v595 = vlaneseq
    %v596 = vshrl.u32 %v595, 7
    %v597 = vsub.s32 %v594, %v596
    %v598 = vrot.slane %v483, %v597
    %vm599 = vcmask 917312
    %v600 = vsel %vm599, %v598, %v593
    %v601 = vadd.s32 %v505, 4294967184
    %v602 = vlaneseq
    %v603 = vshrl.u32 %v602, 7
    %v604 = vsub.s32 %v601, %v603
    %v605 = vrot.slane %v485, %v604
    %vm606 = vcmask 982912
    %v607 = vsel %vm606, %v605, %v600
    %v608 = vadd.s32 %v505, 4294967176
    %v609 = vlaneseq
    %v610 = vshrl.u32 %v609, 7
    %v611 = vsub.s32 %v608, %v610
    %v612 = vrot.slane %v487, %v611
    %vm613 = vcmask 1048512
    %v614 = vsel %vm613, %v612, %v607
    %616 = vst [vmem:[#allocation3] sm:$0x1] %v614
    // Predicated region
    $region22: #{tpu_custom_call.1} parent=1 // pred_check
      _
    $region23: #{tpu_custom_call.1} parent=1 // pred_check_branch
      %618 = sbr.rel (0) target = $region25
    $region24: #{tpu_custom_call.1} parent=1 // pred_region
      %s620 = ssub.s32 16, 16
      %621 = vsyncadd [#allocation4], %s620
      %s623 = sshll.u32 [#allocation3], 4
      %s624 = int_to_ptr.vmem [resolvable:$true] %s623
      %626 = dma.vmem_to_hbm [thread:$0]  %s624, 16, %s5, [#allocation4]
    $region25: #{tpu_custom_call.1} parent=1 // pred_fallthru
      _
    // Predicated region
    $region26: #{tpu_custom_call.1} parent=1 // pred_check
      _
    $region27: #{tpu_custom_call.1} parent=1 // pred_check_branch
      %628 = sbr.rel (0) target = $region29
    $region28: #{tpu_custom_call.1} parent=1 // pred_region
      %629 = dma.done [#allocation4], 16
    $region29: #{tpu_custom_call.1} parent=1 // pred_fallthru
      _
    %630 = vsyncpa [#allocation4], 1

</llo_original>
